<compile_context>
chip_gen: v7x
topology: tpu7x:2x2x1
jax: 0.10.0
libtpu: 0.0.40
codegen_flags: <defaults>
</compile_context>

<pallas_src>
import functools

import jax
import jax.numpy as jnp
from jax.experimental import pallas as pl
from jax.experimental.pallas import tpu as pltpu

_LANES = 128
_SUBLANES = 8
_MAX_ROW_TILE = 8192                 # 8192 x 128 f32 = 4 MiB per input block
_VMEM_LIMIT_BYTES = 32 * 1024 * 1024  # safe on v5e/v6e/v7x, 2x the working set
_MIN_PALLAS_ELEMS = 256 * 1024        # below this, a fused XLA reduce wins


def _round_up(x: int, m: int) -> int:
    return ((x + m - 1) // m) * m


def _tensorcores_per_chip() -> int:
    """Best-effort TensorCore count a 'parallel' grid axis can shard across."""
    try:
        kind = jax.devices()[0].device_kind.lower()
    except Exception:
        return 1
    if "lite" in kind:                    # "TPU v5 lite" / "TPU v6 lite"
        return 1
    for tag in ("v7", "v5p", "v4"):       # dual-TensorCore chips
        if tag in kind:
            return 2
    return 1                              # v5e / v6e / unknown -> safe default


def _mse_kernel(pred_ref, targ_ref, out_ref, acc_ref, *,
                row_tile: int, steps_per_core: int, valid_rows: int,
                needs_mask: bool):
    i = pl.program_id(1)

    @pl.when(i == 0)
    def _():
        acc_ref[...] = jnp.zeros_like(acc_ref)

    d = pred_ref[...].astype(jnp.float32) - targ_ref[...].astype(jnp.float32)
    d2 = d * d

    def accumulate(vals):
        # (row_tile,128) -> (row_tile//8, 8, 128) is a layout-preserving split
        # of the sublane axis; the axis-0 sum is plain VPU vreg adds (no XLU),
        # and the (8,128) accumulator avoids a multi-MiB VMEM RMW per step.
        acc_ref[...] += jnp.sum(vals.reshape(-1, _SUBLANES, _LANES), axis=0)

    if needs_mask:  # static: only traced when some block can hold invalid rows
        block = pl.program_id(0) * steps_per_core + i
        block_start = block * row_tile
        is_full = block_start + row_tile <= valid_rows

        @pl.when(is_full)
        def _():                      # hot path: no iota / compare / select
            accumulate(d2)

        @pl.when(jnp.logical_not(is_full))
        def _():                      # tail / clamped over-assigned blocks only
            row_ids = jax.lax.broadcasted_iota(jnp.int32, (row_tile, _LANES), 0)
            # Keep this a select (jnp.where): out-of-bounds rows may contain
            # garbage / NaN and must not propagate into the accumulator.
            accumulate(jnp.where(block_start + row_ids < valid_rows, d2, 0.0))
    else:
        accumulate(d2)

    @pl.when(i == pl.num_programs(1) - 1)
    def _():
        # Single cross-lane/sublane reduction per core, once at the end.
        out_ref[0, 0] = jnp.sum(acc_ref[...])


def _mse_sum_pallas(p2, t2, rows: int):
    """Sum of squared differences over a lane-dense (rows, 128) slab."""
    itemsize = p2.dtype.itemsize
    sublane_mult = {4: 8, 2: 16, 1: 32}.get(itemsize, 8)
    row_tile = min(_MAX_ROW_TILE, _round_up(rows, sublane_mult))

    num_blocks = pl.cdiv(rows, row_tile)
    n_cores = _tensorcores_per_chip() if num_blocks >= 2 else 1
    steps_per_core = pl.cdiv(num_blocks, n_cores)
    needs_mask = (n_cores * steps_per_core * row_tile) != rows
    last_block = num_blocks - 1

    def in_map(c, i):
        blk = c * steps_per_core + i
        # Blocks assigned past the end (uneven core split / ragged tail) are
        # clamped to a valid window; their contribution is masked to zero.
        return (jnp.minimum(blk, last_block), 0)

    kernel = functools.partial(
        _mse_kernel,
        row_tile=row_tile,
        steps_per_core=steps_per_core,
        valid_rows=rows,
        needs_mask=needs_mask,
    )

    partials = pl.pallas_call(
        kernel,
        out_shape=jax.ShapeDtypeStruct((n_cores, 1), jnp.float32),
        grid_spec=pltpu.PrefetchScalarGridSpec(
            num_scalar_prefetch=0,
            grid=(n_cores, steps_per_core),
            in_specs=[
                # If DMA is still exposed after the bigger tiles, the next knob
                # is pipeline_mode=pl.Buffered(3) on these two specs.
                pl.BlockSpec((row_tile, _LANES), in_map),
                pl.BlockSpec((row_tile, _LANES), in_map),
            ],
            out_specs=pl.BlockSpec((1, 1), lambda c, i: (c, 0),
                                   memory_space=pltpu.MemorySpace.SMEM),
            scratch_shapes=[pltpu.VMEM((_SUBLANES, _LANES), jnp.float32)],
        ),
        compiler_params=pltpu.CompilerParams(
            dimension_semantics=(pltpu.PARALLEL, pltpu.ARBITRARY),
            vmem_limit_bytes=_VMEM_LIMIT_BYTES),
        cost_estimate=pl.CostEstimate(
            flops=3 * rows * _LANES,
            transcendentals=0,
            bytes_accessed=2 * rows * _LANES * itemsize + n_cores * 4),
    )(p2, t2)

    return jnp.sum(partials)


def mse_loss(prediction, target, *, min_pallas_elems: int = _MIN_PALLAS_ELEMS):
    """Pallas TPU implementation of nn.MSELoss()(prediction, target)."""
    assert prediction.shape == target.shape, "MSELoss requires matching shapes"

    n_true = 1
    for s in prediction.shape:
        n_true *= int(s)
    if n_true == 0:
        return jnp.float32(jnp.nan)  # torch mean reduction over 0 elements

    # bf16/f32 go to the kernel unconverted (the kernel casts to f32, halving
    # HBM bytes for bf16); everything else is upcast in the wrapper.
    if not (prediction.dtype == target.dtype
            and prediction.dtype in (jnp.bfloat16, jnp.float32)):
        prediction = prediction.astype(jnp.float32)
        target = target.astype(jnp.float32)

    # Small-input fast path: pallas_call dispatch + pipeline prime dominates.
    if n_true < max(min_pallas_elems, _LANES):
        d = prediction.astype(jnp.float32) - target.astype(jnp.float32)
        return jnp.sum(d * d) / jnp.float32(n_true)

    pred_flat = prediction.reshape(-1)
    targ_flat = target.reshape(-1)

    rows = n_true // _LANES
    main = rows * _LANES
    tail_sse = jnp.float32(0.0)
    if main != n_true:
        # <128-element ragged tail: tiny fused XLA reduce instead of a jnp.pad
        # full-HBM copy of both tensors.
        td = (pred_flat[main:].astype(jnp.float32)
              - targ_flat[main:].astype(jnp.float32))
        tail_sse = jnp.sum(td * td)
        pred_flat = pred_flat[:main]
        targ_flat = targ_flat[:main]

    p2 = pred_flat.reshape(rows, _LANES)   # pure reshape when N % 128 == 0
    t2 = targ_flat.reshape(rows, _LANES)

    return (_mse_sum_pallas(p2, t2, rows) + tail_sse) / jnp.float32(n_true)


class BaseModelPallas:
    """JAX/Pallas port of BaseModel (no parameters: bare nn.Module.__init__)."""

    def forward(self, x):
        # forward is abstract in the PyTorch module; subclasses implement it.
        raise NotImplementedError(
            "Forward method must be implemented by subclasses.")

    def loss(self, prediction, target):
        return mse_loss(prediction, target)

    def save(self, path):
        # TODO(synk): torch.save(state_dict) has no Pallas equivalent; this
        # base class has no parameters, so there is nothing to serialize.
        pass

    def load(self, path):
        # TODO(synk): torch.load/state_dict restore has no Pallas equivalent.
        pass


if __name__ == "__main__":
    key = jax.random.PRNGKey(0)
    k_pred, k_targ = jax.random.split(key)

    model = BaseModelPallas()

    # Small NCHW-shaped prediction/target pair (what loss() consumes).
    shape = (2, 4, 16, 16)
    prediction = jax.random.normal(k_pred, shape, dtype=jnp.float32)
    target = jax.random.normal(k_targ, shape, dtype=jnp.float32)
    loss_val = jax.block_until_ready(model.loss(prediction, target))
    ref = jnp.mean((prediction - target) ** 2)
    assert jnp.allclose(loss_val, ref, rtol=1e-5, atol=1e-5), (loss_val, ref)

    # Force the Pallas kernel on the same small tensors (bypass the fast path).
    loss_small_kernel = jax.block_until_ready(
        mse_loss(prediction, target, min_pallas_elems=0))
    assert jnp.allclose(loss_small_kernel, ref, rtol=1e-5, atol=1e-5), (
        loss_small_kernel, ref)

    # Multi-block / masked-tail / (possible) 2-core-split path.
    big_shape = (8, 16, 96, 100)          # 1,228,800 elems -> 9600 rows
    bp = jax.random.normal(k_pred, big_shape, dtype=jnp.float32)
    bt = jax.random.normal(k_targ, big_shape, dtype=jnp.float32)
    big_val = jax.block_until_ready(model.loss(bp, bt))
    big_ref = jnp.mean((bp - bt) ** 2)
    assert jnp.allclose(big_val, big_ref, rtol=1e-4, atol=1e-4), (big_val, big_ref)

    # Element count not a multiple of 128 -> wrapper tail path + in-kernel mask.
    rag_shape = (7, 11, 59, 61)           # 277,123 elems
    rp = jax.random.normal(k_pred, rag_shape, dtype=jnp.float32)
    rt = jax.random.normal(k_targ, rag_shape, dtype=jnp.float32)
    rag_val = jax.block_until_ready(model.loss(rp, rt))
    rag_ref = jnp.mean((rp - rt) ** 2)
    assert jnp.allclose(rag_val, rag_ref, rtol=1e-4, atol=1e-4), (rag_val, rag_ref)

    print("KERNEL_OK")
</pallas_src>

<mosaic_0001>
module attributes {stable_mosaic.version = 11 : i64} {
  func.func @_mse_kernel(%arg0: i32, %arg1: i32, %arg2: memref<16x128xf32, #tpu.memory_space<vmem>>, %arg3: memref<16x128xf32, #tpu.memory_space<vmem>>, %arg4: memref<1x1xf32, #tpu.memory_space<smem>>, %arg5: memref<8x128xf32, #tpu.memory_space<vmem>>) attributes {dimension_semantics = [#tpu.dimension_semantics<parallel>, #tpu.dimension_semantics<arbitrary>], iteration_bounds = array<i64: 1, 1>, scalar_prefetch = 0 : i64, scratch_operands = 1 : i64, tpu.core_type = #tpu.core_type<tc>, window_params = [{transform_indices = @transform_0, window_bounds = array<i64: 16, 128>}, {transform_indices = @transform_1, window_bounds = array<i64: 16, 128>}, {transform_indices = @transform_2, window_bounds = array<i64: 1, 1>}]} {
    %c0_i32 = arith.constant 0 : i32
    %0 = arith.cmpi eq, %arg1, %c0_i32 : i32
    %1 = arith.extui %0 : i1 to i32
    %c0_i32_0 = arith.constant 0 : i32
    %2 = arith.cmpi ne, %1, %c0_i32_0 : i32
    scf.if %2 {
      %cst_10 = arith.constant 0.000000e+00 : f32
      %15 = vector.broadcast %cst_10 : f32 to vector<8x128xf32>
      %c0_11 = arith.constant 0 : index
      %c0_12 = arith.constant 0 : index
      %16 = vector.load %arg5[%c0_11, %c0_12] : memref<8x128xf32, #tpu.memory_space<vmem>>, vector<8x128xf32>
      tpu.vector_store %arg5[%c0_11, %c0_12], %15 {strides = array<i32>} : memref<8x128xf32, #tpu.memory_space<vmem>>, vector<8x128xf32>,
    } else {
    }
    %c0 = arith.constant 0 : index
    %c0_1 = arith.constant 0 : index
    %3 = vector.load %arg2[%c0, %c0_1] : memref<16x128xf32, #tpu.memory_space<vmem>>, vector<16x128xf32>
    %c0_2 = arith.constant 0 : index
    %c0_3 = arith.constant 0 : index
    %4 = vector.load %arg3[%c0_2, %c0_3] : memref<16x128xf32, #tpu.memory_space<vmem>>, vector<16x128xf32>
    %5 = arith.subf %3, %4 : vector<16x128xf32>
    %6 = arith.mulf %5, %5 : vector<16x128xf32>
    %c0_4 = arith.constant 0 : index
    %c0_5 = arith.constant 0 : index
    %7 = vector.load %arg5[%c0_4, %c0_5] : memref<8x128xf32, #tpu.memory_space<vmem>>, vector<8x128xf32>
    %8 = vector.shape_cast %6 : vector<16x128xf32> to vector<2x8x128xf32>
    %cst = arith.constant dense<0.000000e+00> : vector<8x128xf32>
    %9 = vector.multi_reduction <add>, %8, %cst [0] : vector<2x8x128xf32> to vector<8x128xf32>
    %10 = arith.addf %7, %9 : vector<8x128xf32>
    %c0_6 = arith.constant 0 : index
    %c0_7 = arith.constant 0 : index
    %11 = vector.load %arg5[%c0_6, %c0_7] : memref<8x128xf32, #tpu.memory_space<vmem>>, vector<8x128xf32>
    tpu.vector_store %arg5[%c0_6, %c0_7], %10 {strides = array<i32>} : memref<8x128xf32, #tpu.memory_space<vmem>>, vector<8x128xf32>,
    %c0_i32_8 = arith.constant 0 : i32
    %12 = arith.cmpi eq, %arg1, %c0_i32_8 : i32
    %13 = arith.extui %12 : i1 to i32
    %c0_i32_9 = arith.constant 0 : i32
    %14 = arith.cmpi ne, %13, %c0_i32_9 : i32
    scf.if %14 {
      %c0_10 = arith.constant 0 : index
      %c0_11 = arith.constant 0 : index
      %15 = vector.load %arg5[%c0_10, %c0_11] : memref<8x128xf32, #tpu.memory_space<vmem>>, vector<8x128xf32>
      %16 = vector.shape_cast %15 : vector<8x128xf32> to vector<1x8x128xf32>
      %cst_12 = arith.constant dense<0.000000e+00> : vector<1xf32>
      %17 = vector.multi_reduction <add>, %16, %cst_12 [1, 2] : vector<1x8x128xf32> to vector<1xf32>
      %18 = vector.shape_cast %17 : vector<1xf32> to vector<1x1x1xf32>
      %19 = vector.extract %18[0, 0, 0] : f32 from vector<1x1x1xf32>
      %c0_13 = arith.constant 0 : index
      %c0_14 = arith.constant 0 : index
      %20 = memref.load %arg4[%c0_13, %c0_14] : memref<1x1xf32, #tpu.memory_space<smem>>
      memref.store %19, %arg4[%c0_13, %c0_14] : memref<1x1xf32, #tpu.memory_space<smem>>
    } else {
    }
    return
  }
  func.func @transform_0(%arg0: i32, %arg1: i32) -> (i32, i32) {
    %c1_i32 = arith.constant 1 : i32
    %0 = arith.muli %arg0, %c1_i32 : i32
    %1 = arith.addi %0, %arg1 : i32
    %c0_i32 = arith.constant 0 : i32
    %2 = arith.minsi %1, %c0_i32 : i32
    %c0_i32_0 = arith.constant 0 : i32
    %c0_i32_1 = arith.constant 0 : i32
    return %2, %c0_i32_0 : i32, i32
  }
  func.func @transform_1(%arg0: i32, %arg1: i32) -> (i32, i32) {
    %c1_i32 = arith.constant 1 : i32
    %0 = arith.muli %arg0, %c1_i32 : i32
    %1 = arith.addi %0, %arg1 : i32
    %c0_i32 = arith.constant 0 : i32
    %2 = arith.minsi %1, %c0_i32 : i32
    %c0_i32_0 = arith.constant 0 : i32
    %c0_i32_1 = arith.constant 0 : i32
    return %2, %c0_i32_0 : i32, i32
  }
  func.func @transform_2(%arg0: i32, %arg1: i32) -> (i32, i32) {
    %c0_i32 = arith.constant 0 : i32
    %c0_i32_0 = arith.constant 0 : i32
    return %arg0, %c0_i32 : i32, i32
  }
}

</mosaic_0001>

<llo_original>
// kernel: tpu_custom_call.1
$region0: #{tpu_custom_call.1}
  #allocation0 [shape = 'u32[]', space=smem, size = 0x4, offset = 0x4, fixed_abs, tag = 'smem constant byte address 0x4 - core index']
  #allocation1 [shape = 'u32[144,128]{1,0:T(1,128)}', space=vmem, size = 0x12000, scoped, tag = 'internal scratch']
  #allocation2 [shape = 'f32[8,128]{1,0:T(8,128)}', space=vmem, size = 0x1000, scoped, tag = 'scratch operand']
  %s0 = inlined_call_operand.hbm [shape: f32[16,128], index: 0, kind: input, shape index: {}]
  %s1 = inlined_call_operand.hbm [shape: f32[16,128], index: 1, kind: input, shape index: {}]
  %s2 = inlined_call_operand.hbm [shape: f32[1,1], index: 2, kind: output, shape index: {}]
  %s3 = sld [smem:[#allocation0]]
  $region34: #{tpu_custom_call.1} parent=0
    _
  %s5 = ssub.s32 1, %s3
  %s6 = scalar_select 0, %s5, %s3
  $region1: #{tpu_custom_call.1} parent=0
    #allocation3 [shape = 'u8[8192]{0}', space=vmem, size = 0x2000, scoped, tag = 'input window, operand 0, single buffered']
    #allocation4 [shape = 's32[1]{0}', space=sflag, size = 0x4, scoped, tag = 'scoped memory for tpu_custom_call.1']
    #allocation5 [shape = 's32[1]{0}', space=sflag, size = 0x4, scoped, tag = 'scoped memory for tpu_custom_call.1']
    #allocation6 [shape = 'u8[8192]{0}', space=vmem, size = 0x2000, scoped, tag = 'input window, operand 1, single buffered']
    #allocation7 [shape = 's32[1]{0}', space=sflag, size = 0x4, scoped, tag = 'scoped memory for tpu_custom_call.1']
    #allocation8 [shape = 'u8[512]{0}', space=smem, size = 0x200, scoped, tag = 'output window, operand 0, single buffered']
    %7 = vsyncpa [#allocation4], 0
    %8 = vsyncpa [#allocation7], 0
    %9 = vsyncpa [#allocation5], 0
    // Predicated region
    $region2: #{tpu_custom_call.1} parent=1 // pred_check
      _
    $region3: #{tpu_custom_call.1} parent=1 // pred_check_branch
      %11 = sbr.rel (0) target = $region5
    $region4: #{tpu_custom_call.1} parent=1 // pred_region
      %s12 = sadd.s32 0, 0
      %p13 = scmp.lt.s32.totalorder %s12, 0
      %s14 = scalar_select %p13, %s12, 0
      %s15 = smul.u32 2, %s14
      %s17 = ssub.s32 256, 256
      %18 = vsyncadd [#allocation4], %s17
      %s19 = smul.addr %s15, 128
      %s20 = scalar_lea.hbm %s0, %s19
      %s21 = sshll.u32 [#allocation3], 4
      %s22 = int_to_ptr.vmem [resolvable:$true] %s21
      %27 = dma.hbm_to_vmem [thread:$0]  %s20, 256, %s22, [#allocation4], 128, 128, 8
    $region5: #{tpu_custom_call.1} parent=1 // pred_fallthru
      _
    // Predicated region
    $region6: #{tpu_custom_call.1} parent=1 // pred_check
      _
    $region7: #{tpu_custom_call.1} parent=1 // pred_check_branch
      %29 = sbr.rel (0) target = $region9
    $region8: #{tpu_custom_call.1} parent=1 // pred_region
      %s30 = sadd.s32 0, 0
      %p31 = scmp.lt.s32.totalorder %s30, 0
      %s32 = scalar_select %p31, %s30, 0
      %s33 = smul.u32 2, %s32
      %s35 = ssub.s32 256, 256
      %36 = vsyncadd [#allocation7], %s35
      %s37 = smul.addr %s33, 128
      %s38 = scalar_lea.hbm %s1, %s37
      %s39 = sshll.u32 [#allocation6], 4
      %s40 = int_to_ptr.vmem [resolvable:$true] %s39
      %45 = dma.hbm_to_vmem [thread:$0]  %s38, 256, %s40, [#allocation7], 128, 128, 8
    $region9: #{tpu_custom_call.1} parent=1 // pred_fallthru
      _
    // Predicated region
    $region10: #{tpu_custom_call.1} parent=1 // pred_check
      _
    $region11: #{tpu_custom_call.1} parent=1 // pred_check_branch
      %47 = sbr.rel (0) target = $region13
    $region12: #{tpu_custom_call.1} parent=1 // pred_region
      %48 = dma.done [#allocation4], 256
    $region13: #{tpu_custom_call.1} parent=1 // pred_fallthru
      _
    // Predicated region
    $region14: #{tpu_custom_call.1} parent=1 // pred_check
      _
    $region15: #{tpu_custom_call.1} parent=1 // pred_check_branch
      %50 = sbr.rel (0) target = $region17
    $region16: #{tpu_custom_call.1} parent=1 // pred_region
      %51 = dma.done [#allocation7], 256
    $region17: #{tpu_custom_call.1} parent=1 // pred_fallthru
      _
    %s52 = sadd.s32 0, 0
    %p53 = scmp.lt.s32.totalorder %s52, 0
    %s54 = scalar_select %p53, %s52, 0
    %s55 = smul.u32 2, %s54
    %s56 = sadd.s32 0, 0
    %p57 = scmp.lt.s32.totalorder %s56, 0
    %s58 = scalar_select %p57, %s56, 0
    %s59 = smul.u32 2, %s58
    %p60 = scmp.eq.s32.totalorder 0, 0
    // Predicated region
    $region18: #{tpu_custom_call.1} parent=1 // pred_check
      %p61 = pneg %p60
    $region19: #{tpu_custom_call.1} parent=1 // pred_check_branch
      %63 = sbr.rel (%p61) target = $region21
    $region20: #{tpu_custom_call.1} parent=1 // pred_region
      %64 = vst [vmem:[#allocation2] sm:$0xff] 0.0
    $region21: #{tpu_custom_call.1} parent=1 // pred_fallthru
      _
    %v65 = vld [vmem:[#allocation3] sm:$0xff]
    %v66 = vld [vmem:[#allocation3 + $0x8] sm:$0xff]
    %v67 = vld [vmem:[#allocation6] sm:$0xff]
    %v68 = vld [vmem:[#allocation6 + $0x8] sm:$0xff]
    %v69 = vsub.f32 %v65, %v67
    %v70 = vsub.f32 %v66, %v68
    %v71 = vmul.f32 %v69, %v69
    %v72 = vmul.f32 %v70, %v70
    %v73 = vld [vmem:[#allocation2] sm:$0xff]
    %v74 = vadd.f32 %v71, %v72
    %v75 = vadd.f32 %v73, %v74
    %76 = vst [vmem:[#allocation2] sm:$0xff] %v75
    // Predicated region
    $region22: #{tpu_custom_call.1} parent=1 // pred_check
      %p77 = pneg %p60
    $region23: #{tpu_custom_call.1} parent=1 // pred_check_branch
      %79 = sbr.rel (%p77) target = $region25
    $region24: #{tpu_custom_call.1} parent=1 // pred_region
      %v80 = vld [vmem:[#allocation2] sm:$0xff]
      %81 = vadd.xlane.f32.xlu0 %v80
      %v82 = vpop.xlane.xlu0 %81
      %v83 = vrot.slane %v82, 4
      %v84 = vadd.f32 %v82, %v83
      %v85 = vrot.slane %v84, 2
      %v86 = vadd.f32 %v84, %v85
      %v87 = vrot.slane %v86, 1
      %v88 = vadd.f32 %v86, %v87
      %s89 = vtos %v88
      %s90 = scalar_lea.smem [#allocation8], 0
      %91 = sst [smem:[%s90]] %s89
    $region25: #{tpu_custom_call.1} parent=1 // pred_fallthru
      _
    // Predicated region
    $region26: #{tpu_custom_call.1} parent=1 // pred_check
      _
    $region27: #{tpu_custom_call.1} parent=1 // pred_check_branch
      %93 = sbr.rel (0) target = $region29
    $region28: #{tpu_custom_call.1} parent=1 // pred_region
      %s95 = ssub.s32 16, 16
      %96 = vsyncadd [#allocation5], %s95
      %99 = dma.smem_to_hbm [#allocation8], 16, %s2, [#allocation5]
    $region29: #{tpu_custom_call.1} parent=1 // pred_fallthru
      _
    // Predicated region
    $region30: #{tpu_custom_call.1} parent=1 // pred_check
      _
    $region31: #{tpu_custom_call.1} parent=1 // pred_check_branch
      %101 = sbr.rel (0) target = $region33
    $region32: #{tpu_custom_call.1} parent=1 // pred_region
      %102 = dma.done [#allocation5], 16
    $region33: #{tpu_custom_call.1} parent=1 // pred_fallthru
      _
    %103 = sfence
    %104 = vsyncpa [#allocation4], 1
    %105 = vsyncpa [#allocation7], 1
    %106 = vsyncpa [#allocation5], 1

</llo_original>
